<compile_context>
chip_gen: v7x
topology: tpu7x:2x2x1
jax: 0.10.0
libtpu: 0.0.40
codegen_flags: <defaults>
</compile_context>

<pallas_src>
import math

import jax
import jax.numpy as jnp
from jax.experimental import pallas as pl
from jax.experimental.pallas import tpu as pltpu


def _round_up(x: int, m: int) -> int:
    return (x + m - 1) // m * m


def make_arc_softmax(num_classes: int, scale: float, margin: float,
                     *, tile_b: int | None = None, tile_c: int | None = None,
                     easy_margin: bool = False):
    cos_m = math.cos(margin)
    sin_m = math.sin(margin)
    threshold = math.cos(math.pi - margin)
    mm = math.sin(math.pi - margin) * margin

    def kernel(logits_ref, tgt_ref, out_ref):
        j = pl.program_id(1)                       # class-tile index
        x = logits_ref[...]                        # (tile_b, tile_c) float32
        tb, tc = x.shape

        # ArcFace margin: phi = cos(theta + m) computed from cos(theta) = x.
        # Clamp the radicand so fp rounding of |x| ~ 1 never produces NaN.
        sine = jnp.sqrt(jnp.maximum(1.0 - x * x, 0.0))
        phi = x * cos_m - sine * sin_m
        if easy_margin:
            phi = jnp.where(x > 0.0, phi, x)
        else:
            phi = jnp.where(x > threshold, phi, x - mm)

        # Select phi only on the target column of each row (one-hot select).
        cols = jax.lax.broadcasted_iota(jnp.int32, (tb, tc), 1)
        is_target = cols == (tgt_ref[...] - j * tc)        # tgt_ref: (tile_b, 1)
        out_ref[...] = jnp.where(is_target, phi, x) * scale

    def forward(logits: jax.Array, targets: jax.Array) -> jax.Array:
        assert logits.ndim == 2 and logits.shape[1] == num_classes
        b, c = logits.shape

        # Pick large lane-dense tiles, capped so each block stays ~<= 2 MiB
        # (input + output, double-buffered -> ~8.5 MiB of VMEM; fits the
        # default scoped limit on v5e/v6e/v7x without raising it).
        tc_eff = tile_c if tile_c is not None else min(_round_up(c, 128), 1024)
        tb_eff = tile_b if tile_b is not None else min(_round_up(b, 8), 512)

        b_pad = _round_up(b, tb_eff)
        c_pad = _round_up(c, tc_eff)

        x = logits.astype(jnp.float32)
        if (b_pad, c_pad) != (b, c):
            x = jnp.pad(x, ((0, b_pad - b), (0, c_pad - c)))

        tgt2d = targets.astype(jnp.int32).reshape(b, 1)
        if b_pad != b:
            # Padded rows get target=-1 so they never match a real column.
            tgt2d = jnp.pad(tgt2d, ((0, b_pad - b), (0, 0)), constant_values=-1)

        grid = (b_pad // tb_eff, c_pad // tc_eff)
        out = pl.pallas_call(
            kernel,
            out_shape=jax.ShapeDtypeStruct((b_pad, c_pad), jnp.float32),
            grid_spec=pltpu.PrefetchScalarGridSpec(
                num_scalar_prefetch=0,
                grid=grid,
                in_specs=[
                    # logits tile
                    pl.BlockSpec((tb_eff, tc_eff), lambda i, j: (i, j)),
                    # targets: one column per batch tile, constant across j
                    # so it is not re-DMAed per class tile.
                    pl.BlockSpec((tb_eff, 1), lambda i, j: (i, 0)),
                ],
                out_specs=pl.BlockSpec((tb_eff, tc_eff), lambda i, j: (i, j)),
            ),
            compiler_params=pltpu.CompilerParams(
                dimension_semantics=("parallel", "parallel")),
        )(x, tgt2d)

        if (b_pad, c_pad) != (b, c):
            out = out[:b, :c]
        return out

    return forward


def arc_softmax_ref(logits, targets, num_classes, scale, margin):
    """Pure-JAX reference mirroring the PyTorch module."""
    cos_m = math.cos(margin)
    sin_m = math.sin(margin)
    threshold = math.cos(math.pi - margin)
    mm = math.sin(math.pi - margin) * margin
    x = logits.astype(jnp.float32)
    sine = jnp.sqrt(jnp.maximum(1.0 - x * x, 0.0))
    phi = x * cos_m - sine * sin_m
    phi = jnp.where(x > threshold, phi, x - mm)
    one_hot = jax.nn.one_hot(targets, num_classes, dtype=x.dtype)
    return (one_hot * phi + (1.0 - one_hot) * x) * scale


if __name__ == "__main__":
    # Module "parameters" (ArcSoftmax has no learned weights; just scalars).
    # Use a class count that is NOT a multiple of 128 and a batch that is not
    # a multiple of 8 to exercise the padding / tail handling path.
    NUM_CLASSES = 200
    SCALE = 30.0
    MARGIN = 0.5
    B = 6

    key = jax.random.PRNGKey(0)
    k1, k2 = jax.random.split(key)
    # logits are cosine similarities -> keep them in (-1, 1) like the real use.
    logits = jax.random.uniform(k1, (B, NUM_CLASSES), jnp.float32,
                                minval=-0.99, maxval=0.99)
    targets = jax.random.randint(k2, (B,), 0, NUM_CLASSES, dtype=jnp.int32)

    arc_softmax = make_arc_softmax(NUM_CLASSES, SCALE, MARGIN)
    out = arc_softmax(logits, targets)
    out = jax.block_until_ready(out)

    ref = arc_softmax_ref(logits, targets, NUM_CLASSES, SCALE, MARGIN)
    assert out.shape == (B, NUM_CLASSES) and out.dtype == jnp.float32
    assert jnp.allclose(out, ref, atol=1e-5, rtol=1e-5), "mismatch vs reference"

    print("KERNEL_OK")
</pallas_src>

<mosaic_0001>
module attributes {stable_mosaic.version = 11 : i64} {
  func.func @kernel(%arg0: i32, %arg1: i32, %arg2: memref<8x256xf32, #tpu.memory_space<vmem>>, %arg3: memref<8x1xi32, #tpu.memory_space<vmem>>, %arg4: memref<8x256xf32, #tpu.memory_space<vmem>>) attributes {dimension_semantics = [#tpu.dimension_semantics<parallel>, #tpu.dimension_semantics<parallel>], iteration_bounds = array<i64: 1, 1>, scalar_prefetch = 0 : i64, scratch_operands = 0 : i64, tpu.core_type = #tpu.core_type<tc>, window_params = [{transform_indices = @transform_0, window_bounds = array<i64: 8, 256>}, {transform_indices = @transform_1, window_bounds = array<i64: 8, 1>}, {transform_indices = @transform_2, window_bounds = array<i64: 8, 256>}]} {
    %c0 = arith.constant 0 : index
    %c0_0 = arith.constant 0 : index
    %0 = vector.load %arg2[%c0, %c0_0] : memref<8x256xf32, #tpu.memory_space<vmem>>, vector<8x256xf32>
    %1 = arith.mulf %0, %0 : vector<8x256xf32>
    %cst = arith.constant 1.000000e+00 : f32
    %2 = vector.broadcast %cst : f32 to vector<8x256xf32>
    %3 = arith.subf %2, %1 : vector<8x256xf32>
    %cst_1 = arith.constant 0.000000e+00 : f32
    %4 = vector.broadcast %cst_1 : f32 to vector<8x256xf32>
    %5 = arith.maximumf %3, %4 : vector<8x256xf32>
    %6 = math.sqrt %5 : vector<8x256xf32>
    %cst_2 = arith.constant 0.87758255 : f32
    %7 = vector.broadcast %cst_2 : f32 to vector<8x256xf32>
    %8 = arith.mulf %0, %7 : vector<8x256xf32>
    %cst_3 = arith.constant 0.47942555 : f32
    %9 = vector.broadcast %cst_3 : f32 to vector<8x256xf32>
    %10 = arith.mulf %6, %9 : vector<8x256xf32>
    %11 = arith.subf %8, %10 : vector<8x256xf32>
    %cst_4 = arith.constant -0.87758255 : f32
    %12 = vector.broadcast %cst_4 : f32 to vector<8x256xf32>
    %13 = arith.cmpf ogt, %0, %12 : vector<8x256xf32>
    %cst_5 = arith.constant 0.239712775 : f32
    %14 = vector.broadcast %cst_5 : f32 to vector<8x256xf32>
    %15 = arith.subf %0, %14 : vector<8x256xf32>
    %16 = arith.select %13, %11, %15 : vector<8x256xi1>, vector<8x256xf32>
    %17 = tpu.iota {dimensions = array<i32: 1>} : vector<8x256xi32>
    %c0_6 = arith.constant 0 : index
    %c0_7 = arith.constant 0 : index
    %18 = vector.load %arg3[%c0_6, %c0_7] : memref<8x1xi32, #tpu.memory_space<vmem>>, vector<8x1xi32>
    %c256_i32 = arith.constant 256 : i32
    %19 = arith.muli %arg1, %c256_i32 : i32
    %20 = vector.broadcast %19 : i32 to vector<8x1xi32>
    %21 = arith.subi %18, %20 : vector<8x1xi32>
    %22 = vector.broadcast %21 : vector<8x1xi32> to vector<8x256xi32>
    %23 = arith.cmpi eq, %17, %22 : vector<8x256xi32>
    %24 = arith.select %23, %16, %0 : vector<8x256xi1>, vector<8x256xf32>
    %cst_8 = arith.constant 3.000000e+01 : f32
    %25 = vector.broadcast %cst_8 : f32 to vector<8x256xf32>
    %26 = arith.mulf %24, %25 : vector<8x256xf32>
    %c0_9 = arith.constant 0 : index
    %c0_10 = arith.constant 0 : index
    %27 = vector.load %arg4[%c0_9, %c0_10] : memref<8x256xf32, #tpu.memory_space<vmem>>, vector<8x256xf32>
    tpu.vector_store %arg4[%c0_9, %c0_10], %26 {strides = array<i32>} : memref<8x256xf32, #tpu.memory_space<vmem>>, vector<8x256xf32>,
    return
  }
  func.func @transform_0(%arg0: i32, %arg1: i32) -> (i32, i32) {
    %c0_i32 = arith.constant 0 : i32
    return %arg0, %arg1 : i32, i32
  }
  func.func @transform_1(%arg0: i32, %arg1: i32) -> (i32, i32) {
    %c0_i32 = arith.constant 0 : i32
    %c0_i32_0 = arith.constant 0 : i32
    return %arg0, %c0_i32 : i32, i32
  }
  func.func @transform_2(%arg0: i32, %arg1: i32) -> (i32, i32) {
    %c0_i32 = arith.constant 0 : i32
    return %arg0, %arg1 : i32, i32
  }
}

</mosaic_0001>

<llo_original>
// kernel: tpu_custom_call.1
$region0: #{tpu_custom_call.1}
  #allocation0 [shape = 'u32[]', space=smem, size = 0x4, offset = 0x4, fixed_abs, tag = 'smem constant byte address 0x4 - core index']
  #allocation1 [shape = 'u32[144,128]{1,0:T(1,128)}', space=vmem, size = 0x12000, scoped, tag = 'internal scratch']
  %s0 = inlined_call_operand.hbm [shape: f32[8,256], index: 0, kind: input, shape index: {}]
  %s1 = inlined_call_operand.vmem [shape: s32[8,1], index: 1, kind: input, shape index: {}]
  %s2 = inlined_call_operand.hbm [shape: f32[8,256], index: 2, kind: output, shape index: {}]
  %s3 = sld [smem:[#allocation0]]
  $region22: #{tpu_custom_call.1} parent=0
    _
  %s5 = ssub.s32 1, %s3
  %s6 = scalar_select 0, %s5, %s3
  $region1: #{tpu_custom_call.1} parent=0
    #allocation2 [shape = 'u8[8192]{0}', space=vmem, size = 0x2000, scoped, tag = 'input window, operand 0, single buffered']
    #allocation3 [shape = 's32[1]{0}', space=sflag, size = 0x4, scoped, tag = 'scoped memory for tpu_custom_call.1']
    #allocation4 [shape = 's32[1]{0}', space=sflag, size = 0x4, scoped, tag = 'scoped memory for tpu_custom_call.1']
    #allocation5 [shape = 'u8[8192]{0}', space=vmem, size = 0x2000, scoped, tag = 'output window, operand 0, single buffered']
    %7 = vsyncpa [#allocation3], 0
    %8 = vsyncpa [#allocation4], 0
    // Predicated region
    $region2: #{tpu_custom_call.1} parent=1 // pred_check
      _
    $region3: #{tpu_custom_call.1} parent=1 // pred_check_branch
      %10 = sbr.rel (0) target = $region5
    $region4: #{tpu_custom_call.1} parent=1 // pred_region
      %s12 = ssub.s32 256, 256
      %13 = vsyncadd [#allocation3], %s12
      %s15 = sshll.u32 [#allocation2], 4
      %s16 = int_to_ptr.vmem [resolvable:$true] %s15
      %18 = dma.hbm_to_vmem [thread:$0]  %s0, 256, %s16, [#allocation3]
    $region5: #{tpu_custom_call.1} parent=1 // pred_fallthru
      _
    // Predicated region
    $region6: #{tpu_custom_call.1} parent=1 // pred_check
      _
    $region7: #{tpu_custom_call.1} parent=1 // pred_check_branch
      %20 = sbr.rel (0) target = $region9
    $region8: #{tpu_custom_call.1} parent=1 // pred_region
      _
    $region9: #{tpu_custom_call.1} parent=1 // pred_fallthru
      _
    // Predicated region
    $region10: #{tpu_custom_call.1} parent=1 // pred_check
      _
    $region11: #{tpu_custom_call.1} parent=1 // pred_check_branch
      %22 = sbr.rel (0) target = $region13
    $region12: #{tpu_custom_call.1} parent=1 // pred_region
      %23 = dma.done [#allocation3], 256
    $region13: #{tpu_custom_call.1} parent=1 // pred_fallthru
      _
    %v24 = vld [vmem:[#allocation2] sm:$0xff]
    %v25 = vld [vmem:[#allocation2 + $0x8] sm:$0xff]
    %v26 = vmul.f32 %v24, %v24
    %v27 = vmul.f32 %v25, %v25
    %v28 = vsub.f32 1.0, %v26
    %v29 = vsub.f32 1.0, %v27
    %v30 = vmax.f32 %v28, 0.0
    %v31 = vmax.f32 %v29, 0.0
    %v32 = vrsqrt.pop %v30
    %v33 = vmul.f32 %v30, %v32
    %vm34 = vcmp.eq.f32.partialorder %v30, inf
    %v35 = vsel %vm34, %v30, %v33
    %vm36 = vcmp.eq.f32.partialorder %v30, 0.0
    %v37 = vand.u32 %v30, 2147483648
    %v38 = vsel %vm36, %v37, %v35
    %v39 = vrsqrt.pop %v31
    %v40 = vmul.f32 %v31, %v39
    %vm41 = vcmp.eq.f32.partialorder %v31, inf
    %v42 = vsel %vm41, %v31, %v40
    %vm43 = vcmp.eq.f32.partialorder %v31, 0.0
    %v44 = vand.u32 %v31, 2147483648
    %v45 = vsel %vm43, %v44, %v42
    %v46 = vmul.f32 %v24, 0.87758255
    %v47 = vmul.f32 %v25, 0.87758255
    %v48 = vmul.f32 %v38, 0.47942555
    %v49 = vmul.f32 %v45, 0.47942555
    %v50 = vsub.f32 %v46, %v48
    %v51 = vsub.f32 %v47, %v49
    %vm52 = vcmp.gt.f32.partialorder %v24, -0.87758255
    %vm53 = vcmp.gt.f32.partialorder %v25, -0.87758255
    %v54 = vsub.f32 %v24, 0.23971277
    %v55 = vsub.f32 %v25, 0.23971277
    %v56 = vsel %vm52, %v50, %v54
    %v57 = vsel %vm53, %v51, %v55
    %v58 = vlaneseq
    %v59 = vand.u32 %v58, 127
    %v60 = vadd.s32 %v59, 128
    %v61 = vld [vmem:[%s1] sm:$0xff]
    %s62 = smul.u32 0, 256
    %v63 = vstv %s62
    %v64 = vsub.s32 %v61, %v63
    %65 = vset.pattern.permute.xlu0 0
    %66 = vperm.xlu0 %65, %v64
    %v67 = vpop.permute.xlu0 %66
    %vm68 = vcmp.eq.s32.totalorder %v59, %v67
    %vm69 = vcmp.eq.s32.totalorder %v60, %v67
    %v70 = vsel %vm68, %v56, %v24
    %v71 = vsel %vm69, %v57, %v25
    %v72 = vmul.f32 %v70, 30.0
    %v73 = vmul.f32 %v71, 30.0
    %74 = vst [vmem:[#allocation5] sm:$0xff] %v72
    %75 = vst [vmem:[#allocation5 + $0x8] sm:$0xff] %v73
    // Predicated region
    $region14: #{tpu_custom_call.1} parent=1 // pred_check
      _
    $region15: #{tpu_custom_call.1} parent=1 // pred_check_branch
      %77 = sbr.rel (0) target = $region17
    $region16: #{tpu_custom_call.1} parent=1 // pred_region
      %s79 = ssub.s32 256, 256
      %80 = vsyncadd [#allocation4], %s79
      %s82 = sshll.u32 [#allocation5], 4
      %s83 = int_to_ptr.vmem [resolvable:$true] %s82
      %85 = dma.vmem_to_hbm [thread:$0]  %s83, 256, %s2, [#allocation4]
    $region17: #{tpu_custom_call.1} parent=1 // pred_fallthru
      _
    // Predicated region
    $region18: #{tpu_custom_call.1} parent=1 // pred_check
      _
    $region19: #{tpu_custom_call.1} parent=1 // pred_check_branch
      %87 = sbr.rel (0) target = $region21
    $region20: #{tpu_custom_call.1} parent=1 // pred_region
      %88 = dma.done [#allocation4], 256
    $region21: #{tpu_custom_call.1} parent=1 // pred_fallthru
      _
    %89 = vsyncpa [#allocation3], 1
    %90 = vsyncpa [#allocation4], 1

</llo_original>
